<compile_context>
chip_gen: v6e
topology: v6e:2x2x1
jax: 0.10.0
libtpu: 0.0.40
codegen_flags: <defaults>
</compile_context>

<pallas_src>
import functools

import jax
import jax.numpy as jnp
from jax.experimental import pallas as pl
from jax.experimental.pallas import tpu as pltpu

IN_FEATURES = 28 * 28      # 784 (= 98 * 8, so it's a legal sublane extent; full last dim)
HIDDEN = 100
OUT_FEATURES = 10

HIDDEN_PAD = 128           # full-lane hidden vregs, clean K for second matmul
OUT_PAD = 128              # lane-dense output block (unmasked stores)

DEFAULT_TILE_B = 2048      # multiple of 16; double-buffered f32 x tile ~12.8 MiB


def _cdiv(a: int, b: int) -> int:
    return -(-a // b)


def _round_up(x: int, m: int) -> int:
    return ((x + m - 1) // m) * m


def _choose_tile_b(batch: int, tile_b: int) -> int:
    """Pick a batch tile: multiple of 16 (bf16 sublane packing), never larger
    than the batch extent (except tiny batches), and such that large batches
    produce >= 2 balanced grid steps (v7x megacore sharding)."""
    tile_b = max(16, (tile_b // 16) * 16)
    if batch <= 16:
        return 16
    # >= 2 balanced steps so both v7x TensorCores get work.
    tile_b = min(tile_b, _round_up(_cdiv(batch, 2), 16))
    # Keep block <= array extent; the ragged tail becomes a partial last block.
    tile_b = min(tile_b, (batch // 16) * 16)
    return max(tile_b, 16)


def _kaiming_init(key, scale, size):
    """Matches kaming_init: uniform in [-1/sqrt(scale), +1/sqrt(scale))."""
    bound = 1.0 / jnp.sqrt(jnp.asarray(scale, dtype=jnp.float32))
    u = jax.random.uniform(key, size, dtype=jnp.float32)  # [0, 1)
    return 2.0 * u * bound - bound


def mlp_kernel(x_ref, w1_ref, b1_ref, w2_ref, b2_ref, o_ref):
    # x_ref:  (TILE_B, 784) f32       w1_ref: (784, HIDDEN_PAD) compute_dtype
    # b1_ref: (1, HIDDEN_PAD) f32     w2_ref: (HIDDEN_PAD, OUT_PAD) compute_dtype
    # b2_ref: (1, OUT_PAD) f32        o_ref:  (TILE_B, OUT_PAD) compute_dtype
    #
    # Cast x to the compute dtype in-kernel (VPU work, hidden under the x DMA);
    # no K padding, so every MXU MAC is useful.
    x = x_ref[...].astype(w1_ref.dtype)
    h = jnp.dot(x, w1_ref[...], preferred_element_type=jnp.float32) + b1_ref[...]
    h = jnp.maximum(h, 0.0)
    o = jnp.dot(h.astype(w2_ref.dtype), w2_ref[...],
                preferred_element_type=jnp.float32) + b2_ref[...]
    o_ref[...] = o.astype(o_ref.dtype)


@functools.partial(jax.jit, static_argnames=("compute_dtype", "tile_b"))
def simple_mlp_forward(x, w1, b1, w2, b2, *,
                       compute_dtype=jnp.bfloat16, tile_b=DEFAULT_TILE_B):
    """x: (B, 1, 28, 28) float32 (NCHW).  Returns (B, 10) float32.

    w1: (100, 784), b1: (100,), w2: (10, 100), b2: (10,)  -- PyTorch layout.
    """
    B = x.shape[0]
    x_flat = x.reshape(B, -1)                       # Flatten(start_dim=1); free reshape, stays f32

    tile_b = _choose_tile_b(B, tile_b)
    if x_flat.shape[0] < tile_b:
        # Tiny batches only (< 16 rows): pad rows so the single block does not
        # exceed the array extent.  Negligible copy at this size.
        x_flat = jnp.pad(x_flat, ((0, tile_b - x_flat.shape[0]), (0, 0)))
    rows = x_flat.shape[0]
    num_tiles = _cdiv(rows, tile_b)                 # ragged tail -> partial last x block
    b_out = num_tiles * tile_b                      # output blocks always full (unmasked vst)

    # Lane-padded weights (tiny, stay resident in VMEM across the whole grid).
    # Zero padding keeps the math exact: padded hidden columns are relu(0+b=0)=0
    # wait -- padded b1 entries are zero too, so relu(0)=0 hits zero w2 rows, and
    # padded output columns get zero bias and are sliced off.
    w1_p = jnp.zeros((IN_FEATURES, HIDDEN_PAD), dtype=compute_dtype)
    w1_p = w1_p.at[:, :HIDDEN].set(w1.T.astype(compute_dtype))
    b1_p = jnp.zeros((1, HIDDEN_PAD), jnp.float32).at[:, :HIDDEN].set(b1)

    w2_p = jnp.zeros((HIDDEN_PAD, OUT_PAD), dtype=compute_dtype)
    w2_p = w2_p.at[:HIDDEN, :OUT_FEATURES].set(w2.T.astype(compute_dtype))
    b2_p = jnp.zeros((1, OUT_PAD), jnp.float32).at[:, :OUT_FEATURES].set(b2)

    out_itemsize = jnp.dtype(compute_dtype).itemsize
    w_itemsize = jnp.dtype(compute_dtype).itemsize
    cost = pl.CostEstimate(
        flops=2 * rows * (IN_FEATURES * HIDDEN_PAD + HIDDEN_PAD * OUT_PAD),
        transcendentals=0,
        bytes_accessed=(rows * IN_FEATURES * 4                                  # x (f32 in)
                        + (IN_FEATURES * HIDDEN_PAD + HIDDEN_PAD * OUT_PAD) * w_itemsize
                        + (HIDDEN_PAD + OUT_PAD) * 4                            # biases
                        + b_out * OUT_PAD * out_itemsize),                      # output
    )

    out_padded = pl.pallas_call(
        mlp_kernel,
        out_shape=jax.ShapeDtypeStruct((b_out, OUT_PAD), compute_dtype),
        grid=(num_tiles,),
        in_specs=[
            pl.BlockSpec((tile_b, IN_FEATURES), lambda i: (i, 0)),      # x: batch-tiled, no K pad
            pl.BlockSpec((IN_FEATURES, HIDDEN_PAD), lambda i: (0, 0)),  # weights stay resident
            pl.BlockSpec((1, HIDDEN_PAD), lambda i: (0, 0)),
            pl.BlockSpec((HIDDEN_PAD, OUT_PAD), lambda i: (0, 0)),
            pl.BlockSpec((1, OUT_PAD), lambda i: (0, 0)),
        ],
        out_specs=pl.BlockSpec((tile_b, OUT_PAD), lambda i: (i, 0)),
        compiler_params=pltpu.CompilerParams(
            dimension_semantics=("parallel",),      # independent batch tiles (v7x: 2 TCs)
            vmem_limit_bytes=32 * 1024 * 1024,      # fits v7x's scoped VMEM too
        ),
        cost_estimate=cost,
    )(x_flat, w1_p, b1_p, w2_p, b2_p)

    # Single slice+cast back to (B, 10) f32; keep further post-processing fused
    # with the downstream consumer rather than adding passes here.
    return out_padded[:B, :OUT_FEATURES].astype(jnp.float32)


if __name__ == "__main__":
    key = jax.random.PRNGKey(0)
    k_x, k_w1, k_b1, k_w2, k_b2 = jax.random.split(key, 5)

    # Small MNIST-like batch, NCHW like the PyTorch module expects.
    B = 2
    x = jax.random.normal(k_x, (B, 1, 28, 28), dtype=jnp.float32)

    # Deterministic parameter init replicating Linear.__init__ / kaming_init.
    w1 = _kaiming_init(k_w1, IN_FEATURES, (HIDDEN, IN_FEATURES))   # (100, 784)
    b1 = _kaiming_init(k_b1, IN_FEATURES, (HIDDEN,))               # (100,)
    w2 = _kaiming_init(k_w2, HIDDEN, (OUT_FEATURES, HIDDEN))       # (10, 100)
    b2 = _kaiming_init(k_b2, HIDDEN, (OUT_FEATURES,))              # (10,)

    # Pure-JAX f32 reference of the same forward pass.
    x_flat = x.reshape(B, -1)
    ref = jnp.maximum(x_flat @ w1.T + b1, 0.0) @ w2.T + b2

    # Exact f32 path.
    out_f32 = jax.block_until_ready(
        simple_mlp_forward(x, w1, b1, w2, b2, compute_dtype=jnp.float32))
    assert out_f32.shape == (B, OUT_FEATURES)
    assert jnp.allclose(out_f32, ref, atol=1e-5, rtol=1e-5)

    # Default bandwidth-optimized bf16 path (f32 accumulation, bf16 writeback):
    # logits carry ~2-3 significant digits -> loose tolerance.
    out_bf16 = jax.block_until_ready(simple_mlp_forward(x, w1, b1, w2, b2))
    assert out_bf16.shape == (B, OUT_FEATURES)
    assert jnp.allclose(out_bf16, ref, atol=3e-2, rtol=3e-2)

    print("KERNEL_OK")
</pallas_src>

<mosaic_0001>
module attributes {stable_mosaic.version = 11 : i64} {
  func.func @mlp_kernel(%arg0: i32, %arg1: memref<16x784xf32, #tpu.memory_space<vmem>>, %arg2: memref<784x128xf32, #tpu.memory_space<vmem>>, %arg3: memref<1x128xf32, #tpu.memory_space<vmem>>, %arg4: memref<128x128xf32, #tpu.memory_space<vmem>>, %arg5: memref<1x128xf32, #tpu.memory_space<vmem>>, %arg6: memref<16x128xf32, #tpu.memory_space<vmem>>) attributes {dimension_semantics = [#tpu.dimension_semantics<parallel>], iteration_bounds = array<i64: 1>, scalar_prefetch = 0 : i64, scratch_operands = 0 : i64, tpu.core_type = #tpu.core_type<tc>, window_params = [{transform_indices = @transform_0, window_bounds = array<i64: 16, 784>}, {pipeline_mode = #tpu.pipeline_mode<synchronous>, transform_indices = @transform_1, window_bounds = array<i64: 784, 128>}, {pipeline_mode = #tpu.pipeline_mode<synchronous>, transform_indices = @transform_2, window_bounds = array<i64: 1, 128>}, {pipeline_mode = #tpu.pipeline_mode<synchronous>, transform_indices = @transform_3, window_bounds = array<i64: 128, 128>}, {pipeline_mode = #tpu.pipeline_mode<synchronous>, transform_indices = @transform_4, window_bounds = array<i64: 1, 128>}, {transform_indices = @transform_5, window_bounds = array<i64: 16, 128>}]} {
    %c0 = arith.constant 0 : index
    %c0_0 = arith.constant 0 : index
    %0 = vector.load %arg1[%c0, %c0_0] : memref<16x784xf32, #tpu.memory_space<vmem>>, vector<16x784xf32>
    %c0_1 = arith.constant 0 : index
    %c0_2 = arith.constant 0 : index
    %1 = vector.load %arg2[%c0_1, %c0_2] : memref<784x128xf32, #tpu.memory_space<vmem>>, vector<784x128xf32>
    %cst = arith.constant dense<0.000000e+00> : vector<16x128xf32>
    %2 = tpu.matmul %0, %1, %cst {dimension_numbers = #tpu.dot_dimension_numbers<[1], [0], [0], [1], [0, 0, 1, 1], [], []>} : vector<16x784xf32>, vector<784x128xf32>, vector<16x128xf32> -> vector<16x128xf32>
    %c0_3 = arith.constant 0 : index
    %c0_4 = arith.constant 0 : index
    %3 = vector.load %arg3[%c0_3, %c0_4] : memref<1x128xf32, #tpu.memory_space<vmem>>, vector<1x128xf32>
    %4 = vector.broadcast %3 : vector<1x128xf32> to vector<16x128xf32>
    %5 = arith.addf %2, %4 : vector<16x128xf32>
    %cst_5 = arith.constant 0.000000e+00 : f32
    %6 = vector.broadcast %cst_5 : f32 to vector<16x128xf32>
    %7 = arith.maximumf %5, %6 : vector<16x128xf32>
    %c0_6 = arith.constant 0 : index
    %c0_7 = arith.constant 0 : index
    %8 = vector.load %arg4[%c0_6, %c0_7] : memref<128x128xf32, #tpu.memory_space<vmem>>, vector<128x128xf32>
    %cst_8 = arith.constant dense<0.000000e+00> : vector<16x128xf32>
    %9 = tpu.matmul %7, %8, %cst_8 {dimension_numbers = #tpu.dot_dimension_numbers<[1], [0], [0], [1], [0, 0, 1, 1], [], []>} : vector<16x128xf32>, vector<128x128xf32>, vector<16x128xf32> -> vector<16x128xf32>
    %c0_9 = arith.constant 0 : index
    %c0_10 = arith.constant 0 : index
    %10 = vector.load %arg5[%c0_9, %c0_10] : memref<1x128xf32, #tpu.memory_space<vmem>>, vector<1x128xf32>
    %11 = vector.broadcast %10 : vector<1x128xf32> to vector<16x128xf32>
    %12 = arith.addf %9, %11 : vector<16x128xf32>
    %c0_11 = arith.constant 0 : index
    %c0_12 = arith.constant 0 : index
    %13 = vector.load %arg6[%c0_11, %c0_12] : memref<16x128xf32, #tpu.memory_space<vmem>>, vector<16x128xf32>
    tpu.vector_store %arg6[%c0_11, %c0_12], %12 {strides = array<i32>} : memref<16x128xf32, #tpu.memory_space<vmem>>, vector<16x128xf32>,
    return
  }
  func.func @transform_0(%arg0: i32) -> (i32, i32) {
    %c0_i32 = arith.constant 0 : i32
    %c0_i32_0 = arith.constant 0 : i32
    return %arg0, %c0_i32 : i32, i32
  }
  func.func @transform_1(%arg0: i32) -> (i32, i32) {
    %c0_i32 = arith.constant 0 : i32
    %c0_i32_0 = arith.constant 0 : i32
    %c0_i32_1 = arith.constant 0 : i32
    return %c0_i32, %c0_i32_0 : i32, i32
  }
  func.func @transform_2(%arg0: i32) -> (i32, i32) {
    %c0_i32 = arith.constant 0 : i32
    %c0_i32_0 = arith.constant 0 : i32
    %c0_i32_1 = arith.constant 0 : i32
    return %c0_i32, %c0_i32_0 : i32, i32
  }
  func.func @transform_3(%arg0: i32) -> (i32, i32) {
    %c0_i32 = arith.constant 0 : i32
    %c0_i32_0 = arith.constant 0 : i32
    %c0_i32_1 = arith.constant 0 : i32
    return %c0_i32, %c0_i32_0 : i32, i32
  }
  func.func @transform_4(%arg0: i32) -> (i32, i32) {
    %c0_i32 = arith.constant 0 : i32
    %c0_i32_0 = arith.constant 0 : i32
    %c0_i32_1 = arith.constant 0 : i32
    return %c0_i32, %c0_i32_0 : i32, i32
  }
  func.func @transform_5(%arg0: i32) -> (i32, i32) {
    %c0_i32 = arith.constant 0 : i32
    %c0_i32_0 = arith.constant 0 : i32
    return %arg0, %c0_i32 : i32, i32
  }
}

</mosaic_0001>

<llo_original>
// kernel: simple_mlp_forward.1
$region0: #{simple_mlp_forward.1}
  #allocation0 [shape = 'u32[]', space=smem, size = 0x4, offset = 0x4, fixed_abs, tag = 'smem constant byte address 0x4 - core index']
  #allocation1 [shape = 'u32[144,128]{1,0:T(1,128)}', space=vmem, size = 0x12000, scoped, tag = 'internal scratch']
  %s0 = inlined_call_operand.vmem [shape: f32[16,784], index: 0, kind: input, shape index: {}]
  %s1 = inlined_call_operand.vmem [shape: f32[784,128], index: 1, kind: input, shape index: {}]
  %s2 = inlined_call_operand.vmem [shape: f32[1,128], index: 2, kind: input, shape index: {}]
  %s3 = inlined_call_operand.vmem [shape: f32[128,128], index: 3, kind: input, shape index: {}]
  %s4 = inlined_call_operand.vmem [shape: f32[1,128], index: 4, kind: input, shape index: {}]
  %s5 = inlined_call_operand.vmem [shape: f32[16,128], index: 5, kind: output, shape index: {}]
  %s6 = sld [smem:[#allocation0]]
  $region30: #{simple_mlp_forward.1} parent=0
    _
  %s8 = ssub.s32 1, %s6
  %s9 = scalar_select 0, %s8, %s6
  // Predicated region
  $region2: #{simple_mlp_forward.1} parent=0 // pred_check
    _
  $region3: #{simple_mlp_forward.1} parent=0 // pred_check_branch
    %11 = sbr.rel (0) target = $region5
  $region4: #{simple_mlp_forward.1} parent=0 // pred_region
    _
  $region5: #{simple_mlp_forward.1} parent=0 // pred_fallthru
    _
  // Predicated region
  $region6: #{simple_mlp_forward.1} parent=0 // pred_check
    _
  $region7: #{simple_mlp_forward.1} parent=0 // pred_check_branch
    %13 = sbr.rel (0) target = $region9
  $region8: #{simple_mlp_forward.1} parent=0 // pred_region
    _
  $region9: #{simple_mlp_forward.1} parent=0 // pred_fallthru
    _
  // Predicated region
  $region10: #{simple_mlp_forward.1} parent=0 // pred_check
    _
  $region11: #{simple_mlp_forward.1} parent=0 // pred_check_branch
    %15 = sbr.rel (0) target = $region13
  $region12: #{simple_mlp_forward.1} parent=0 // pred_region
    _
  $region13: #{simple_mlp_forward.1} parent=0 // pred_fallthru
    _
  // Predicated region
  $region14: #{simple_mlp_forward.1} parent=0 // pred_check
    _
  $region15: #{simple_mlp_forward.1} parent=0 // pred_check_branch
    %17 = sbr.rel (0) target = $region17
  $region16: #{simple_mlp_forward.1} parent=0 // pred_region
    _
  $region17: #{simple_mlp_forward.1} parent=0 // pred_fallthru
    _
  // Predicated region
  $region18: #{simple_mlp_forward.1} parent=0 // pred_check
    _
  $region19: #{simple_mlp_forward.1} parent=0 // pred_check_branch
    %19 = sbr.rel (0) target = $region21
  $region20: #{simple_mlp_forward.1} parent=0 // pred_region
    _
  $region21: #{simple_mlp_forward.1} parent=0 // pred_fallthru
    _
  %v20 = vld [vmem:[%s0] sm:$0xff]
  %v21 = vld [vmem:[%s0 + $0x8] sm:$0xff]
  %v22 = vld [vmem:[%s0 + $0x10] sm:$0xff]
  %v23 = vld [vmem:[%s0 + $0x18] sm:$0xff]
  %v24 = vld [vmem:[%s0 + $0x20] sm:$0xff]
  %v25 = vld [vmem:[%s0 + $0x28] sm:$0xff]
  %v26 = vld [vmem:[%s0 + $0x30] sm:$0xff]
  %v27 = vld [vmem:[%s0 + $0x38] sm:$0xff]
  %v28 = vld [vmem:[%s0 + $0x40] sm:$0xff]
  %v29 = vld [vmem:[%s0 + $0x48] sm:$0xff]
  %v30 = vld [vmem:[%s0 + $0x50] sm:$0xff]
  %v31 = vld [vmem:[%s0 + $0x58] sm:$0xff]
  %v32 = vld [vmem:[%s0 + $0x60] sm:$0xff]
  %v33 = vld [vmem:[%s0 + $0x68] sm:$0xff]
  %v34 = vld [vmem:[%s1] sm:$0xff]
  %v35 = vld [vmem:[%s1 + $0x8] sm:$0xff]
  %v36 = vld [vmem:[%s1 + $0x10] sm:$0xff]
  %v37 = vld [vmem:[%s1 + $0x18] sm:$0xff]
  %v38 = vld [vmem:[%s1 + $0x20] sm:$0xff]
  %v39 = vld [vmem:[%s1 + $0x28] sm:$0xff]
  %v40 = vld [vmem:[%s1 + $0x30] sm:$0xff]
  %v41 = vld [vmem:[%s1 + $0x38] sm:$0xff]
  %v42 = vld [vmem:[%s1 + $0x40] sm:$0xff]
  %v43 = vld [vmem:[%s1 + $0x48] sm:$0xff]
  %v44 = vld [vmem:[%s1 + $0x50] sm:$0xff]
  %v45 = vld [vmem:[%s1 + $0x58] sm:$0xff]
  %v46 = vld [vmem:[%s1 + $0x60] sm:$0xff]
  %v47 = vld [vmem:[%s1 + $0x68] sm:$0xff]
  %v48 = vld [vmem:[%s1 + $0x70] sm:$0xff]
  %v49 = vld [vmem:[%s1 + $0x78] sm:$0xff]
  %v50 = vld [vmem:[%s1 + $0x80] sm:$0xff]
  %v51 = vld [vmem:[%s1 + $0x88] sm:$0xff]
  %v52 = vld [vmem:[%s1 + $0x90] sm:$0xff]
  %v53 = vld [vmem:[%s1 + $0x98] sm:$0xff]
  %v54 = vld [vmem:[%s1 + $0xa0] sm:$0xff]
  %v55 = vld [vmem:[%s1 + $0xa8] sm:$0xff]
  %v56 = vld [vmem:[%s1 + $0xb0] sm:$0xff]
  %v57 = vld [vmem:[%s1 + $0xb8] sm:$0xff]
  %v58 = vld [vmem:[%s1 + $0xc0] sm:$0xff]
  %v59 = vld [vmem:[%s1 + $0xc8] sm:$0xff]
  %v60 = vld [vmem:[%s1 + $0xd0] sm:$0xff]
  %v61 = vld [vmem:[%s1 + $0xd8] sm:$0xff]
  %v62 = vld [vmem:[%s1 + $0xe0] sm:$0xff]
  %v63 = vld [vmem:[%s1 + $0xe8] sm:$0xff]
  %v64 = vld [vmem:[%s1 + $0xf0] sm:$0xff]
  %v65 = vld [vmem:[%s1 + $0xf8] sm:$0xff]
  %v66 = vld [vmem:[%s1 + $0x100] sm:$0xff]
  %v67 = vld [vmem:[%s1 + $0x108] sm:$0xff]
  %v68 = vld [vmem:[%s1 + $0x110] sm:$0xff]
  %v69 = vld [vmem:[%s1 + $0x118] sm:$0xff]
  %v70 = vld [vmem:[%s1 + $0x120] sm:$0xff]
  %v71 = vld [vmem:[%s1 + $0x128] sm:$0xff]
  %v72 = vld [vmem:[%s1 + $0x130] sm:$0xff]
  %v73 = vld [vmem:[%s1 + $0x138] sm:$0xff]
  %v74 = vld [vmem:[%s1 + $0x140] sm:$0xff]
  %v75 = vld [vmem:[%s1 + $0x148] sm:$0xff]
  %v76 = vld [vmem:[%s1 + $0x150] sm:$0xff]
  %v77 = vld [vmem:[%s1 + $0x158] sm:$0xff]
  %v78 = vld [vmem:[%s1 + $0x160] sm:$0xff]
  %v79 = vld [vmem:[%s1 + $0x168] sm:$0xff]
  %v80 = vld [vmem:[%s1 + $0x170] sm:$0xff]
  %v81 = vld [vmem:[%s1 + $0x178] sm:$0xff]
  %v82 = vld [vmem:[%s1 + $0x180] sm:$0xff]
  %v83 = vld [vmem:[%s1 + $0x188] sm:$0xff]
  %v84 = vld [vmem:[%s1 + $0x190] sm:$0xff]
  %v85 = vld [vmem:[%s1 + $0x198] sm:$0xff]
  %v86 = vld [vmem:[%s1 + $0x1a0] sm:$0xff]
  %v87 = vld [vmem:[%s1 + $0x1a8] sm:$0xff]
  %v88 = vld [vmem:[%s1 + $0x1b0] sm:$0xff]
  %v89 = vld [vmem:[%s1 + $0x1b8] sm:$0xff]
  %v90 = vld [vmem:[%s1 + $0x1c0] sm:$0xff]
  %v91 = vld [vmem:[%s1 + $0x1c8] sm:$0xff]
  %v92 = vld [vmem:[%s1 + $0x1d0] sm:$0xff]
  %v93 = vld [vmem:[%s1 + $0x1d8] sm:$0xff]
  %v94 = vld [vmem:[%s1 + $0x1e0] sm:$0xff]
  %v95 = vld [vmem:[%s1 + $0x1e8] sm:$0xff]
  %v96 = vld [vmem:[%s1 + $0x1f0] sm:$0xff]
  %v97 = vld [vmem:[%s1 + $0x1f8] sm:$0xff]
  %v98 = vld [vmem:[%s1 + $0x200] sm:$0xff]
  %v99 = vld [vmem:[%s1 + $0x208] sm:$0xff]
  %v100 = vld [vmem:[%s1 + $0x210] sm:$0xff]
  %v101 = vld [vmem:[%s1 + $0x218] sm:$0xff]
  %v102 = vld [vmem:[%s1 + $0x220] sm:$0xff]
  %v103 = vld [vmem:[%s1 + $0x228] sm:$0xff]
  %v104 = vld [vmem:[%s1 + $0x230] sm:$0xff]
  %v105 = vld [vmem:[%s1 + $0x238] sm:$0xff]
  %v106 = vld [vmem:[%s1 + $0x240] sm:$0xff]
  %v107 = vld [vmem:[%s1 + $0x248] sm:$0xff]
  %v108 = vld [vmem:[%s1 + $0x250] sm:$0xff]
  %v109 = vld [vmem:[%s1 + $0x258] sm:$0xff]
  %v110 = vld [vmem:[%s1 + $0x260] sm:$0xff]
  %v111 = vld [vmem:[%s1 + $0x268] sm:$0xff]
  %v112 = vld [vmem:[%s1 + $0x270] sm:$0xff]
  %v113 = vld [vmem:[%s1 + $0x278] sm:$0xff]
  %v114 = vld [vmem:[%s1 + $0x280] sm:$0xff]
  %v115 = vld [vmem:[%s1 + $0x288] sm:$0xff]
  %v116 = vld [vmem:[%s1 + $0x290] sm:$0xff]
  %v117 = vld [vmem:[%s1 + $0x298] sm:$0xff]
  %v118 = vld [vmem:[%s1 + $0x2a0] sm:$0xff]
  %v119 = vld [vmem:[%s1 + $0x2a8] sm:$0xff]
  %v120 = vld [vmem:[%s1 + $0x2b0] sm:$0xff]
  %v121 = vld [vmem:[%s1 + $0x2b8] sm:$0xff]
  %v122 = vld [vmem:[%s1 + $0x2c0] sm:$0xff]
  %v123 = vld [vmem:[%s1 + $0x2c8] sm:$0xff]
  %v124 = vld [vmem:[%s1 + $0x2d0] sm:$0xff]
  %v125 = vld [vmem:[%s1 + $0x2d8] sm:$0xff]
  %v126 = vld [vmem:[%s1 + $0x2e0] sm:$0xff]
  %v127 = vld [vmem:[%s1 + $0x2e8] sm:$0xff]
  %v128 = vld [vmem:[%s1 + $0x2f0] sm:$0xff]
  %v129 = vld [vmem:[%s1 + $0x2f8] sm:$0xff]
  %v130 = vld [vmem:[%s1 + $0x300] sm:$0xff]
  %v131 = vld [vmem:[%s1 + $0x308] sm:$0xff]
  %v132 = vld [vmem:[%s2] sm:$0x1]
  %v134 = vlaneseq
  %v135 = vshrl.u32 %v134, 7
  %v136 = vsub.s32 0, %v135
  %v137 = vrot.slane %v132, %v136
  %vm139 = vcmask 130048
  %v141 = vsel %vm139, %v26, 0
  %v144 = vsel %vm139, %v33, 0
  %146 = vmatprep.subr.mxu0 0.0
  %147 = vmatpush1.msra.mxu0 %v49
  %148 = vmatprep.subr.mxu0 0.0
  %149 = vmatpush1.msra.mxu0 %v48
  %150 = vmatprep.subr.mxu0 0.0
  %151 = vmatpush1.msra.mxu0 %v47
  %152 = vmatprep.subr.mxu0 0.0
  %153 = vmatpush1.msra.mxu0 %v46
  %154 = vmatprep.subr.mxu0 0.0
  %155 = vmatpush1.msra.mxu0 %v45
  %156 = vmatprep.subr.mxu0 0.0
  %157 = vmatpush1.msra.mxu0 %v44
  %158 = vmatprep.subr.mxu0 0.0
  %159 = vmatpush1.msra.mxu0 %v43
  %160 = vmatprep.subr.mxu0 0.0
  %161 = vmatpush1.msra.mxu0 %v42
  %162 = vmatprep.subr.mxu0 0.0
  %163 = vmatpush1.msra.mxu0 %v41
  %164 = vmatprep.subr.mxu0 0.0
  %165 = vmatpush1.msra.mxu0 %v40
  %166 = vmatprep.subr.mxu0 0.0
  %167 = vmatpush1.msra.mxu0 %v39
  %168 = vmatprep.subr.mxu0 0.0
  %169 = vmatpush1.msra.mxu0 %v38
  %170 = vmatprep.subr.mxu0 0.0
  %171 = vmatpush1.msra.mxu0 %v37
  %172 = vmatprep.subr.mxu0 0.0
  %173 = vmatpush1.msra.mxu0 %v36
  %174 = vmatprep.subr.mxu0 0.0
  %175 = vmatpush1.msra.mxu0 %v35
  %176 = vmatprep.subr.mxu0 0.0
  %177 = vmatpush1.msra.mxu0 %v34
  %178 = vmatprep.subr.mxu0 0.0
  %179 = vmatpush2.msra.mxu0 %v65
  %180 = vmatprep.subr.mxu0 0.0
  %181 = vmatpush2.msra.mxu0 %v64
  %182 = vmatprep.subr.mxu0 0.0
  %183 = vmatpush2.msra.mxu0 %v63
  %184 = vmatprep.subr.mxu0 0.0
  %185 = vmatpush2.msra.mxu0 %v62
  %186 = vmatprep.subr.mxu0 0.0
  %187 = vmatpush2.msra.mxu0 %v61
  %188 = vmatprep.subr.mxu0 0.0
  %189 = vmatpush2.msra.mxu0 %v60
  %190 = vmatprep.subr.mxu0 0.0
  %191 = vmatpush2.msra.mxu0 %v59
  %192 = vmatprep.subr.mxu0 0.0
  %193 = vmatpush2.msra.mxu0 %v58
  %194 = vmatprep.subr.mxu0 0.0
  %195 = vmatpush2.msra.mxu0 %v57
  %196 = vmatprep.subr.mxu0 0.0
  %197 = vmatpush2.msra.mxu0 %v56
  %198 = vmatprep.subr.mxu0 0.0
  %199 = vmatpush2.msra.mxu0 %v55
  %200 = vmatprep.subr.mxu0 0.0
  %201 = vmatpush2.msra.mxu0 %v54
  %202 = vmatprep.subr.mxu0 0.0
  %203 = vmatpush2.msra.mxu0 %v53
  %204 = vmatprep.subr.mxu0 0.0
  %205 = vmatpush2.msra.mxu0 %v52
  %206 = vmatprep.subr.mxu0 0.0
  %207 = vmatpush2.msra.mxu0 %v51
  %208 = vmatprep.subr.mxu0 0.0
  %209 = vmatpush2.msra.mxu0 %v50
  %210 = vmatprep.mubr.f32.mxu0 %v21
  %211 = vmatmul.mubr.f32.gmra.mxu0 %v20
  %v212 = vpop.f32.mrf.mxu0
  %v213 = vadd.f32 %v137, %v212
  %v214 = vpop.f32.mrf.mxu0
  %215 = vmatprep.mubr.f32.mxu0 %v28
  %216 = vmatmul.mubr.f32.gmra.mxu0 %v27
  %v217 = vpop.f32.mrf.mxu0
  %v218 = vadd.f32 %v137, %v217
  %v219 = vpop.f32.mrf.mxu0
  %220 = vdwg.mxu0
  %221 = vmatprep.subr.mxu0 0.0
  %222 = vmatpush1.msra.mxu0 %v81
  %223 = vmatprep.subr.mxu0 0.0
  %224 = vmatpush1.msra.mxu0 %v80
  %225 = vmatprep.subr.mxu0 0.0
  %226 = vmatpush1.msra.mxu0 %v79
  %227 = vmatprep.subr.mxu0 0.0
  %228 = vmatpush1.msra.mxu0 %v78
  %229 = vmatprep.subr.mxu0 0.0
  %230 = vmatpush1.msra.mxu0 %v77
  %231 = vmatprep.subr.mxu0 0.0
  %232 = vmatpush1.msra.mxu0 %v76
  %233 = vmatprep.subr.mxu0 0.0
  %234 = vmatpush1.msra.mxu0 %v75
  %235 = vmatprep.subr.mxu0 0.0
  %236 = vmatpush1.msra.mxu0 %v74
  %237 = vmatprep.subr.mxu0 0.0
  %238 = vmatpush1.msra.mxu0 %v73
  %239 = vmatprep.subr.mxu0 0.0
  %240 = vmatpush1.msra.mxu0 %v72
  %241 = vmatprep.subr.mxu0 0.0
  %242 = vmatpush1.msra.mxu0 %v71
  %243 = vmatprep.subr.mxu0 0.0
  %244 = vmatpush1.msra.mxu0 %v70
  %245 = vmatprep.subr.mxu0 0.0
  %246 = vmatpush1.msra.mxu0 %v69
  %247 = vmatprep.subr.mxu0 0.0
  %248 = vmatpush1.msra.mxu0 %v68
  %249 = vmatprep.subr.mxu0 0.0
  %250 = vmatpush1.msra.mxu0 %v67
  %251 = vmatprep.subr.mxu0 0.0
  %252 = vmatpush1.msra.mxu0 %v66
  %253 = vmatprep.subr.mxu0 0.0
  %254 = vmatpush2.msra.mxu0 %v97
  %255 = vmatprep.subr.mxu0 0.0
  %256 = vmatpush2.msra.mxu0 %v96
  %257 = vmatprep.subr.mxu0 0.0
  %258 = vmatpush2.msra.mxu0 %v95
  %259 = vmatprep.subr.mxu0 0.0
  %260 = vmatpush2.msra.mxu0 %v94
  %261 = vmatprep.subr.mxu0 0.0
  %262 = vmatpush2.msra.mxu0 %v93
  %263 = vmatprep.subr.mxu0 0.0
  %264 = vmatpush2.msra.mxu0 %v92
  %265 = vmatprep.subr.mxu0 0.0
  %266 = vmatpush2.msra.mxu0 %v91
  %267 = vmatprep.subr.mxu0 0.0
  %268 = vmatpush2.msra.mxu0 %v90
  %269 = vmatprep.subr.mxu0 0.0
  %270 = vmatpush2.msra.mxu0 %v89
  %271 = vmatprep.subr.mxu0 0.0
  %272 = vmatpush2.msra.mxu0 %v88
  %273 = vmatprep.subr.mxu0 0.0
  %274 = vmatpush2.msra.mxu0 %v87
  %275 = vmatprep.subr.mxu0 0.0
  %276 = vmatpush2.msra.mxu0 %v86
  %277 = vmatprep.subr.mxu0 0.0
  %278 = vmatpush2.msra.mxu0 %v85
  %279 = vmatprep.subr.mxu0 0.0
  %280 = vmatpush2.msra.mxu0 %v84
  %281 = vmatprep.subr.mxu0 0.0
  %282 = vmatpush2.msra.mxu0 %v83
  %283 = vmatprep.subr.mxu0 0.0
  %284 = vmatpush2.msra.mxu0 %v82
  %285 = vmatprep.mubr.f32.mxu0 %v23
  %286 = vmatmul.mubr.f32.gmra.mxu0 %v22
  %v287 = vpop.f32.mrf.mxu0
  %v288 = vadd.f32 %v213, %v287
  %v289 = vpop.f32.mrf.mxu0
  %290 = vmatprep.mubr.f32.mxu0 %v30
  %291 = vmatmul.mubr.f32.gmra.mxu0 %v29
  %v292 = vpop.f32.mrf.mxu0
  %v293 = vadd.f32 %v218, %v292
  %v294 = vpop.f32.mrf.mxu0
  %295 = vdwg.mxu0
  %296 = vmatprep.subr.mxu0 0.0
  %297 = vmatpush1.msra.mxu0 %v113
  %298 = vmatprep.subr.mxu0 0.0
  %299 = vmatpush1.msra.mxu0 %v112
  %300 = vmatprep.subr.mxu0 0.0
  %301 = vmatpush1.msra.mxu0 %v111
  %302 = vmatprep.subr.mxu0 0.0
  %303 = vmatpush1.msra.mxu0 %v110
  %304 = vmatprep.subr.mxu0 0.0
  %305 = vmatpush1.msra.mxu0 %v109
  %306 = vmatprep.subr.mxu0 0.0
  %307 = vmatpush1.msra.mxu0 %v108
  %308 = vmatprep.subr.mxu0 0.0
  %309 = vmatpush1.msra.mxu0 %v107
  %310 = vmatprep.subr.mxu0 0.0
  %311 = vmatpush1.msra.mxu0 %v106
  %312 = vmatprep.subr.mxu0 0.0
  %313 = vmatpush1.msra.mxu0 %v105
  %314 = vmatprep.subr.mxu0 0.0
  %315 = vmatpush1.msra.mxu0 %v104
  %316 = vmatprep.subr.mxu0 0.0
  %317 = vmatpush1.msra.mxu0 %v103
  %318 = vmatprep.subr.mxu0 0.0
  %319 = vmatpush1.msra.mxu0 %v102
  %320 = vmatprep.subr.mxu0 0.0
  %321 = vmatpush1.msra.mxu0 %v101
  %322 = vmatprep.subr.mxu0 0.0
  %323 = vmatpush1.msra.mxu0 %v100
  %324 = vmatprep.subr.mxu0 0.0
  %325 = vmatpush1.msra.mxu0 %v99
  %326 = vmatprep.subr.mxu0 0.0
  %327 = vmatpush1.msra.mxu0 %v98
  %328 = vmatprep.subr.mxu0 0.0
  %329 = vmatpush2.msra.mxu0 %v129
  %330 = vmatprep.subr.mxu0 0.0
  %331 = vmatpush2.msra.mxu0 %v128
  %332 = vmatprep.subr.mxu0 0.0
  %333 = vmatpush2.msra.mxu0 %v127
  %334 = vmatprep.subr.mxu0 0.0
  %335 = vmatpush2.msra.mxu0 %v126
  %336 = vmatprep.subr.mxu0 0.0
  %337 = vmatpush2.msra.mxu0 %v125
  %338 = vmatprep.subr.mxu0 0.0
  %339 = vmatpush2.msra.mxu0 %v124
  %340 = vmatprep.subr.mxu0 0.0
  %341 = vmatpush2.msra.mxu0 %v123
  %342 = vmatprep.subr.mxu0 0.0
  %343 = vmatpush2.msra.mxu0 %v122
  %344 = vmatprep.subr.mxu0 0.0
  %345 = vmatpush2.msra.mxu0 %v121
  %346 = vmatprep.subr.mxu0 0.0
  %347 = vmatpush2.msra.mxu0 %v120
  %348 = vmatprep.subr.mxu0 0.0
  %349 = vmatpush2.msra.mxu0 %v119
  %350 = vmatprep.subr.mxu0 0.0
  %351 = vmatpush2.msra.mxu0 %v118
  %352 = vmatprep.subr.mxu0 0.0
  %353 = vmatpush2.msra.mxu0 %v117
  %354 = vmatprep.subr.mxu0 0.0
  %355 = vmatpush2.msra.mxu0 %v116
  %356 = vmatprep.subr.mxu0 0.0
  %357 = vmatpush2.msra.mxu0 %v115
  %358 = vmatprep.subr.mxu0 0.0
  %359 = vmatpush2.msra.mxu0 %v114
  %360 = vmatprep.mubr.f32.mxu0 %v25
  %361 = vmatmul.mubr.f32.gmra.mxu0 %v24
  %v362 = vpop.f32.mrf.mxu0
  %v363 = vadd.f32 %v288, %v362
  %v364 = vpop.f32.mrf.mxu0
  %365 = vmatprep.mubr.f32.mxu0 %v32
  %366 = vmatmul.mubr.f32.gmra.mxu0 %v31
  %v367 = vpop.f32.mrf.mxu0
  %v368 = vadd.f32 %v293, %v367
  %v369 = vpop.f32.mrf.mxu0
  %370 = vdwg.mxu0
  %371 = vmatprep.subr.mxu0 0.0
  %372 = vmatpush1.msra.mxu0 0.0
  %373 = vmatprep.subr.mxu0 0.0
  %374 = vmatpush1.msra.mxu0 0.0
  %375 = vmatprep.subr.mxu0 0.0
  %376 = vmatpush1.msra.mxu0 0.0
  %377 = vmatprep.subr.mxu0 0.0
  %378 = vmatpush1.msra.mxu0 0.0
  %379 = vmatprep.subr.mxu0 0.0
  %380 = vmatpush1.msra.mxu0 0.0
  %381 = vmatprep.subr.mxu0 0.0
  %382 = vmatpush1.msra.mxu0 0.0
  %383 = vmatprep.subr.mxu0 0.0
  %384 = vmatpush1.msra.mxu0 0.0
  %385 = vmatprep.subr.mxu0 0.0
  %386 = vmatpush1.msra.mxu0 0.0
  %387 = vmatprep.subr.mxu0 0.0
  %388 = vmatpush1.msra.mxu0 0.0
  %389 = vmatprep.subr.mxu0 0.0
  %390 = vmatpush1.msra.mxu0 0.0
  %391 = vmatprep.subr.mxu0 0.0
  %392 = vmatpush1.msra.mxu0 0.0
  %393 = vmatprep.subr.mxu0 0.0
  %394 = vmatpush1.msra.mxu0 0.0
  %395 = vmatprep.subr.mxu0 0.0
  %396 = vmatpush1.msra.mxu0 0.0
  %397 = vmatprep.subr.mxu0 0.0
  %398 = vmatpush1.msra.mxu0 0.0
  %399 = vmatprep.subr.mxu0 0.0
  %400 = vmatpush1.msra.mxu0 %v131
  %401 = vmatprep.subr.mxu0 0.0
  %402 = vmatpush1.msra.mxu0 %v130
  %403 = vmatprep.subr.mxu0 0.0
  %404 = vmatpush2.msra.mxu0 0.0
  %405 = vmatprep.subr.mxu0 0.0
  %406 = vmatpush2.msra.mxu0 0.0
  %407 = vmatprep.subr.mxu0 0.0
  %408 = vmatpush2.msra.mxu0 0.0
  %409 = vmatprep.subr.mxu0 0.0
  %410 = vmatpush2.msra.mxu0 0.0
  %411 = vmatprep.subr.mxu0 0.0
  %412 = vmatpush2.msra.mxu0 0.0
  %413 = vmatprep.subr.mxu0 0.0
  %414 = vmatpush2.msra.mxu0 0.0
  %415 = vmatprep.subr.mxu0 0.0
  %416 = vmatpush2.msra.mxu0 0.0
  %417 = vmatprep.subr.mxu0 0.0
  %418 = vmatpush2.msra.mxu0 0.0
  %419 = vmatprep.subr.mxu0 0.0
  %420 = vmatpush2.msra.mxu0 0.0
  %421 = vmatprep.subr.mxu0 0.0
  %422 = vmatpush2.msra.mxu0 0.0
  %423 = vmatprep.subr.mxu0 0.0
  %424 = vmatpush2.msra.mxu0 0.0
  %425 = vmatprep.subr.mxu0 0.0
  %426 = vmatpush2.msra.mxu0 0.0
  %427 = vmatprep.subr.mxu0 0.0
  %428 = vmatpush2.msra.mxu0 0.0
  %429 = vmatprep.subr.mxu0 0.0
  %430 = vmatpush2.msra.mxu0 0.0
  %431 = vmatprep.subr.mxu0 0.0
  %432 = vmatpush2.msra.mxu0 0.0
  %433 = vmatprep.subr.mxu0 0.0
  %434 = vmatpush2.msra.mxu0 0.0
  %435 = vmatprep.mubr.f32.mxu0 0.0
  %436 = vmatmul.mubr.f32.gmra.mxu0 %v141
  %v437 = vpop.f32.mrf.mxu0
  %v438 = vadd.f32 %v363, %v437
  %v439 = vpop.f32.mrf.mxu0
  %440 = vmatprep.mubr.f32.mxu0 0.0
  %441 = vmatmul.mubr.f32.gmra.mxu0 %v144
  %v442 = vpop.f32.mrf.mxu0
  %v443 = vadd.f32 %v368, %v442
  %v444 = vpop.f32.mrf.mxu0
  %445 = vdwg.mxu0
  %v446 = vmax.f32 %v438, 0.0
  %v447 = vmax.f32 %v443, 0.0
  %v448 = vld [vmem:[%s3] sm:$0xff]
  %v449 = vld [vmem:[%s3 + $0x8] sm:$0xff]
  %v450 = vld [vmem:[%s3 + $0x10] sm:$0xff]
  %v451 = vld [vmem:[%s3 + $0x18] sm:$0xff]
  %v452 = vld [vmem:[%s3 + $0x20] sm:$0xff]
  %v453 = vld [vmem:[%s3 + $0x28] sm:$0xff]
  %v454 = vld [vmem:[%s3 + $0x30] sm:$0xff]
  %v455 = vld [vmem:[%s3 + $0x38] sm:$0xff]
  %v456 = vld [vmem:[%s3 + $0x40] sm:$0xff]
  %v457 = vld [vmem:[%s3 + $0x48] sm:$0xff]
  %v458 = vld [vmem:[%s3 + $0x50] sm:$0xff]
  %v459 = vld [vmem:[%s3 + $0x58] sm:$0xff]
  %v460 = vld [vmem:[%s3 + $0x60] sm:$0xff]
  %v461 = vld [vmem:[%s3 + $0x68] sm:$0xff]
  %v462 = vld [vmem:[%s3 + $0x70] sm:$0xff]
  %v463 = vld [vmem:[%s3 + $0x78] sm:$0xff]
  %v464 = vld [vmem:[%s4] sm:$0x1]
  %v466 = vlaneseq
  %v467 = vshrl.u32 %v466, 7
  %v468 = vsub.s32 0, %v467
  %v469 = vrot.slane %v464, %v468
  %471 = vmatprep.subr.mxu0 0.0
  %472 = vmatpush1.msra.mxu0 %v463
  %473 = vmatprep.subr.mxu0 0.0
  %474 = vmatpush1.msra.mxu0 %v462
  %475 = vmatprep.subr.mxu0 0.0
  %476 = vmatpush1.msra.mxu0 %v461
  %477 = vmatprep.subr.mxu0 0.0
  %478 = vmatpush1.msra.mxu0 %v460
  %479 = vmatprep.subr.mxu0 0.0
  %480 = vmatpush1.msra.mxu0 %v459
  %481 = vmatprep.subr.mxu0 0.0
  %482 = vmatpush1.msra.mxu0 %v458
  %483 = vmatprep.subr.mxu0 0.0
  %484 = vmatpush1.msra.mxu0 %v457
  %485 = vmatprep.subr.mxu0 0.0
  %486 = vmatpush1.msra.mxu0 %v456
  %487 = vmatprep.subr.mxu0 0.0
  %488 = vmatpush1.msra.mxu0 %v455
  %489 = vmatprep.subr.mxu0 0.0
  %490 = vmatpush1.msra.mxu0 %v454
  %491 = vmatprep.subr.mxu0 0.0
  %492 = vmatpush1.msra.mxu0 %v453
  %493 = vmatprep.subr.mxu0 0.0
  %494 = vmatpush1.msra.mxu0 %v452
  %495 = vmatprep.subr.mxu0 0.0
  %496 = vmatpush1.msra.mxu0 %v451
  %497 = vmatprep.subr.mxu0 0.0
  %498 = vmatpush1.msra.mxu0 %v450
  %499 = vmatprep.subr.mxu0 0.0
  %500 = vmatpush1.msra.mxu0 %v449
  %501 = vmatprep.subr.mxu0 0.0
  %502 = vmatpush1.msra.mxu0 %v448
  %503 = vmatprep.subr.mxu0 0.0
  %504 = vmatpush2.msra.mxu0 0.0
  %505 = vmatprep.subr.mxu0 0.0
  %506 = vmatpush2.msra.mxu0 0.0
  %507 = vmatprep.subr.mxu0 0.0
  %508 = vmatpush2.msra.mxu0 0.0
  %509 = vmatprep.subr.mxu0 0.0
  %510 = vmatpush2.msra.mxu0 0.0
  %511 = vmatprep.subr.mxu0 0.0
  %512 = vmatpush2.msra.mxu0 0.0
  %513 = vmatprep.subr.mxu0 0.0
  %514 = vmatpush2.msra.mxu0 0.0
  %515 = vmatprep.subr.mxu0 0.0
  %516 = vmatpush2.msra.mxu0 0.0
  %517 = vmatprep.subr.mxu0 0.0
  %518 = vmatpush2.msra.mxu0 0.0
  %519 = vmatprep.subr.mxu0 0.0
  %520 = vmatpush2.msra.mxu0 0.0
  %521 = vmatprep.subr.mxu0 0.0
  %522 = vmatpush2.msra.mxu0 0.0
  %523 = vmatprep.subr.mxu0 0.0
  %524 = vmatpush2.msra.mxu0 0.0
  %525 = vmatprep.subr.mxu0 0.0
  %526 = vmatpush2.msra.mxu0 0.0
  %527 = vmatprep.subr.mxu0 0.0
  %528 = vmatpush2.msra.mxu0 0.0
  %529 = vmatprep.subr.mxu0 0.0
  %530 = vmatpush2.msra.mxu0 0.0
  %531 = vmatprep.subr.mxu0 0.0
  %532 = vmatpush2.msra.mxu0 0.0
  %533 = vmatprep.subr.mxu0 0.0
  %534 = vmatpush2.msra.mxu0 0.0
  %535 = vmatprep.mubr.f32.mxu0 0.0
  %536 = vmatmul.mubr.f32.gmra.mxu0 %v446
  %v537 = vpop.f32.mrf.mxu0
  %v538 = vadd.f32 %v469, %v537
  %v539 = vpop.f32.mrf.mxu0
  %540 = vmatprep.mubr.f32.mxu0 0.0
  %541 = vmatmul.mubr.f32.gmra.mxu0 %v447
  %v542 = vpop.f32.mrf.mxu0
  %v543 = vadd.f32 %v469, %v542
  %v544 = vpop.f32.mrf.mxu0
  %545 = vdwg.mxu0
  %546 = vst [vmem:[%s5] sm:$0xff] %v538
  %547 = vst [vmem:[%s5 + $0x8] sm:$0xff] %v543
  // Predicated region
  $region22: #{simple_mlp_forward.1} parent=0 // pred_check
    _
  $region23: #{simple_mlp_forward.1} parent=0 // pred_check_branch
    %549 = sbr.rel (0) target = $region25
  $region24: #{simple_mlp_forward.1} parent=0 // pred_region
    _
  $region25: #{simple_mlp_forward.1} parent=0 // pred_fallthru
    _
  // Predicated region
  $region26: #{simple_mlp_forward.1} parent=0 // pred_check
    _
  $region27: #{simple_mlp_forward.1} parent=0 // pred_check_branch
    %551 = sbr.rel (0) target = $region29
  $region28: #{simple_mlp_forward.1} parent=0 // pred_region
    _
  $region29: #{simple_mlp_forward.1} parent=0 // pred_fallthru
    _

</llo_original>
